<compile_context>
chip_gen: v5e
topology: v5e:2x2
jax: 0.10.0
libtpu: 0.0.40
codegen_flags: <defaults>
</compile_context>

<pallas_src>
import jax
import jax.numpy as jnp
from jax import lax
from jax.experimental import pallas as pl
from jax.experimental.pallas import tpu as pltpu


def _round_up(x, m):
    return ((x + m - 1) // m) * m


def _pick_tile(B, block_b):
    """Lane-aligned batch tile; >=2 grid blocks once B is big (v7x megacore)."""
    tb = _round_up(min(block_b, max(B, 1)), 128)
    if B > 256:
        half = _round_up(-(-B // 2), 128)
        tb = min(tb, half)
    return max(tb, 128)


# ----------------------------------------------------------------------------
# Primary path: in-kernel gather (tables resident in VMEM, one-hot @ table).
# ----------------------------------------------------------------------------
def _transh_fused_kernel(idx_ref, ent_t_ref, reln_t_ref, out_ref):
    # idx_ref:    (3, TB)  int32   rows = (h, r, t)
    # ent_t_ref:  (D, E)   float32 entity table, transposed
    # reln_t_ref: (2D, R)  float32 [rel_embs ; norm_vector] table, transposed
    # out_ref:    (1, TB)  float32 lane-dense scores
    D = ent_t_ref.shape[0]
    E = ent_t_ref.shape[1]
    R = reln_t_ref.shape[1]
    tb = idx_ref.shape[1]

    hs = idx_ref[0:1, :]                                   # (1, TB)
    rs = idx_ref[1:2, :]
    ts = idx_ref[2:3, :]

    ent_rows = lax.broadcasted_iota(jnp.int32, (E, tb), 0)  # (E, TB)
    rel_rows = lax.broadcasted_iota(jnp.int32, (R, tb), 0)  # (R, TB)

    oh_h = (ent_rows == hs).astype(jnp.float32)             # (E, TB)
    oh_t = (ent_rows == ts).astype(jnp.float32)
    oh_r = (rel_rows == rs).astype(jnp.float32)             # (R, TB)

    # Gather via MXU (idle otherwise): table^T @ one_hot -> (D, TB) columns.
    e_h = jnp.dot(ent_t_ref[...], oh_h, preferred_element_type=jnp.float32)
    e_t = jnp.dot(ent_t_ref[...], oh_t, preferred_element_type=jnp.float32)
    rn = jnp.dot(reln_t_ref[...], oh_r, preferred_element_type=jnp.float32)
    e_r = rn[:D, :]                                          # (D, TB)
    n = rn[D:, :]                                            # (D, TB)

    dot_h = jnp.sum(e_h * n, axis=0, keepdims=True)          # (1, TB)
    dot_t = jnp.sum(e_t * n, axis=0, keepdims=True)
    proj_h = e_h - dot_h * n
    proj_t = e_t - dot_t * n
    d = proj_h + e_r - proj_t                                # (D, TB)
    out_ref[...] = -jnp.sqrt(jnp.sum(d * d, axis=0, keepdims=True))


def _transh_fused(ent_embs, rel_embs, norm_vector, hs, rs, ts, block_b):
    B = hs.shape[0]
    E, D = ent_embs.shape
    R = rel_embs.shape[0]

    tb = _pick_tile(B, block_b)
    b_pad = _round_up(B, tb)
    pad = b_pad - B

    idx = jnp.stack([hs, rs, ts], axis=0).astype(jnp.int32)   # (3, B)
    if pad:
        # Pad the (cheap) int32 indices with 0 — row 0 is a real, finite row,
        # so the padded scores are finite and simply sliced off below.
        idx = jnp.pad(idx, ((0, 0), (0, pad)))

    # One-time tiny table preps (parameters, not batch-sized data).
    ent_t = ent_embs.T.astype(jnp.float32)                               # (D, E)
    reln_t = jnp.concatenate([rel_embs, norm_vector], axis=1).T.astype(  # (2D, R)
        jnp.float32)

    grid = (b_pad // tb,)
    scores = pl.pallas_call(
        _transh_fused_kernel,
        out_shape=jax.ShapeDtypeStruct((1, b_pad), jnp.float32),
        grid=grid,
        in_specs=[
            pl.BlockSpec((3, tb), lambda i: (0, i)),
            pl.BlockSpec((D, E), lambda i: (0, 0)),        # resident table
            pl.BlockSpec((2 * D, R), lambda i: (0, 0)),    # resident table
        ],
        out_specs=pl.BlockSpec((1, tb), lambda i: (0, i)),
        compiler_params=pltpu.CompilerParams(
            dimension_semantics=("parallel",),
            vmem_limit_bytes=32 * 1024 * 1024,
        ),
    )(idx, ent_t, reln_t)
    return scores[0, :B].reshape(B, 1)


# ----------------------------------------------------------------------------
# Fallback path: JAX-side gather (large tables), streamed (TB, D) blocks.
# ----------------------------------------------------------------------------
def _transh_streaming_kernel(eh_ref, et_ref, ern_ref, out_ref):
    # eh_ref/et_ref: (TB, D); ern_ref: (TB, 2D) = [e_r | n]; out_ref: (TB, 1)
    D = eh_ref.shape[1]
    e_h = eh_ref[...]
    e_t = et_ref[...]
    ern = ern_ref[...]
    e_r = ern[:, :D]
    n = ern[:, D:]

    dot_h = jnp.sum(e_h * n, axis=1, keepdims=True)          # (TB, 1)
    dot_t = jnp.sum(e_t * n, axis=1, keepdims=True)
    proj_h = e_h - dot_h * n
    proj_t = e_t - dot_t * n
    d = proj_h + e_r - proj_t
    out_ref[...] = -jnp.sqrt(jnp.sum(d * d, axis=1, keepdims=True))


def _pick_tile_streaming(B, D, block_b):
    # 4D f32 per row across the 3 input streams, x2 pipeline buffers.
    per_row_bytes = 4 * D * 4 * 2
    budget = 16 * 1024 * 1024
    cap = max(128, (budget // per_row_bytes) // 128 * 128)
    return min(_pick_tile(B, block_b), cap)


def _transh_streaming(ent_embs, rel_embs, norm_vector, hs, rs, ts, block_b):
    B = hs.shape[0]
    D = ent_embs.shape[1]

    tb = _pick_tile_streaming(B, D, block_b)
    b_pad = _round_up(B, tb)
    pad = b_pad - B
    if pad:
        # Pad indices (3 ints per row) BEFORE gathering — never pad the
        # gathered float arrays. Index 0 is a real row, so math stays finite.
        hs = jnp.pad(hs, (0, pad))
        rs = jnp.pad(rs, (0, pad))
        ts = jnp.pad(ts, (0, pad))

    # Single rs-gather for relation embedding + hyperplane normal.
    rel_norm = jnp.concatenate([rel_embs, norm_vector], axis=1).astype(jnp.float32)
    e_h = jnp.take(ent_embs.astype(jnp.float32), hs, axis=0)   # (b_pad, D)
    e_t = jnp.take(ent_embs.astype(jnp.float32), ts, axis=0)   # (b_pad, D)
    e_rn = jnp.take(rel_norm, rs, axis=0)                      # (b_pad, 2D)

    grid = (b_pad // tb,)
    scores = pl.pallas_call(
        _transh_streaming_kernel,
        out_shape=jax.ShapeDtypeStruct((b_pad, 1), jnp.float32),
        grid=grid,
        in_specs=[
            pl.BlockSpec((tb, D), lambda i: (i, 0)),
            pl.BlockSpec((tb, D), lambda i: (i, 0)),
            pl.BlockSpec((tb, 2 * D), lambda i: (i, 0)),
        ],
        out_specs=pl.BlockSpec((tb, 1), lambda i: (i, 0)),
        compiler_params=pltpu.CompilerParams(
            dimension_semantics=("parallel",),
            allow_input_fusion=[True, True, True],
            vmem_limit_bytes=32 * 1024 * 1024,
        ),
    )(e_h, e_t, e_rn)
    return scores[:B].reshape(B, 1)


# ----------------------------------------------------------------------------
# Public entry point.
# ----------------------------------------------------------------------------
def transh_forward(ent_embs, rel_embs, norm_vector, batch, *, block_b=None,
                   force_jax_gather=False):
    """batch: (B, 3) int array of (h, r, t) triples -> (B, 1) float32 scores."""
    batch = jnp.asarray(batch)
    hs = batch[:, 0].astype(jnp.int32)
    rs = batch[:, 1].astype(jnp.int32)
    ts = batch[:, 2].astype(jnp.int32)
    E, D = ent_embs.shape
    R = rel_embs.shape[0]

    table_bytes = (E + 2 * R) * D * 4
    fits_vmem = (E <= 512) and (R <= 512) and (table_bytes <= (4 << 20))
    if fits_vmem and not force_jax_gather:
        return _transh_fused(ent_embs, rel_embs, norm_vector, hs, rs, ts,
                             block_b if block_b is not None else 1024)
    return _transh_streaming(ent_embs, rel_embs, norm_vector, hs, rs, ts,
                             block_b if block_b is not None else 8192)


def transh_reference(ent_embs, rel_embs, norm_vector, batch):
    hs, rs, ts = batch[:, 0], batch[:, 1], batch[:, 2]
    e_h = jnp.take(ent_embs, hs, axis=0)
    e_r = jnp.take(rel_embs, rs, axis=0)
    e_t = jnp.take(ent_embs, ts, axis=0)
    n = jnp.take(norm_vector, rs, axis=0)
    proj_h = e_h - jnp.sum(e_h * n, axis=1, keepdims=True) * n
    proj_t = e_t - jnp.sum(e_t * n, axis=1, keepdims=True) * n
    d = proj_h + e_r - proj_t
    return -jnp.sqrt(jnp.sum(d * d, axis=1)).reshape(-1, 1)


if __name__ == "__main__":
    num_ent, num_rel, emb_dim = 50, 12, 32
    margin, epsilon = 2.0, 2.0
    emb_range = (margin + epsilon) / emb_dim  # uniform init range, per __init__

    key = jax.random.PRNGKey(0)
    k_ent, k_rel, k_norm, k_h, k_r, k_t = jax.random.split(key, 6)

    ent_embs = jax.random.uniform(
        k_ent, (num_ent, emb_dim), jnp.float32, -emb_range, emb_range)
    rel_embs = jax.random.uniform(
        k_rel, (num_rel, emb_dim), jnp.float32, -emb_range, emb_range)
    norm_vector = jax.random.uniform(
        k_norm, (num_rel, emb_dim), jnp.float32, -emb_range, emb_range)

    batch_size = 8
    hs = jax.random.randint(k_h, (batch_size,), 0, num_ent, jnp.int32)
    rs = jax.random.randint(k_r, (batch_size,), 0, num_rel, jnp.int32)
    ts = jax.random.randint(k_t, (batch_size,), 0, num_ent, jnp.int32)
    batch = jnp.stack([hs, rs, ts], axis=1)  # (B, 3)

    ref = transh_reference(ent_embs, rel_embs, norm_vector, batch)

    # Primary path: in-kernel gather (tables fit in VMEM here).
    score = transh_forward(ent_embs, rel_embs, norm_vector, batch)
    jax.block_until_ready(score)
    assert score.shape == (batch_size, 1)
    assert jnp.allclose(score, ref, atol=1e-5, rtol=1e-5)

    # Fallback path: JAX-side gather + streaming kernel (large-table route).
    score_fb = transh_forward(ent_embs, rel_embs, norm_vector, batch,
                              force_jax_gather=True)
    jax.block_until_ready(score_fb)
    assert score_fb.shape == (batch_size, 1)
    assert jnp.allclose(score_fb, ref, atol=1e-5, rtol=1e-5)

    print("KERNEL_OK")
</pallas_src>

<mosaic_0001>
module attributes {stable_mosaic.version = 11 : i64} {
  func.func @_transh_fused_kernel(%arg0: i32, %arg1: memref<3x128xi32, #tpu.memory_space<vmem>>, %arg2: memref<32x50xf32, #tpu.memory_space<vmem>>, %arg3: memref<64x12xf32, #tpu.memory_space<vmem>>, %arg4: memref<1x128xf32, #tpu.memory_space<vmem>>) attributes {dimension_semantics = [#tpu.dimension_semantics<parallel>], iteration_bounds = array<i64: 1>, scalar_prefetch = 0 : i64, scratch_operands = 0 : i64, tpu.core_type = #tpu.core_type<tc>, window_params = [{transform_indices = @transform_0, window_bounds = array<i64: 3, 128>}, {pipeline_mode = #tpu.pipeline_mode<synchronous>, transform_indices = @transform_1, window_bounds = array<i64: 32, 50>}, {pipeline_mode = #tpu.pipeline_mode<synchronous>, transform_indices = @transform_2, window_bounds = array<i64: 64, 12>}, {transform_indices = @transform_3, window_bounds = array<i64: 1, 128>}]} {
    %c0 = arith.constant 0 : index
    %c0_0 = arith.constant 0 : index
    %0 = vector.load %arg1[%c0, %c0_0] : memref<3x128xi32, #tpu.memory_space<vmem>>, vector<1x128xi32>
    %c1 = arith.constant 1 : index
    %c0_1 = arith.constant 0 : index
    %1 = vector.load %arg1[%c1, %c0_1] : memref<3x128xi32, #tpu.memory_space<vmem>>, vector<1x128xi32>
    %c2 = arith.constant 2 : index
    %c0_2 = arith.constant 0 : index
    %2 = vector.load %arg1[%c2, %c0_2] : memref<3x128xi32, #tpu.memory_space<vmem>>, vector<1x128xi32>
    %3 = tpu.iota {dimensions = array<i32: 0>} : vector<50x128xi32>
    %4 = tpu.iota {dimensions = array<i32: 0>} : vector<12x128xi32>
    %5 = vector.broadcast %0 : vector<1x128xi32> to vector<50x128xi32>
    %6 = arith.cmpi eq, %3, %5 : vector<50x128xi32>
    %7 = arith.extui %6 : vector<50x128xi1> to vector<50x128xi32>
    %8 = arith.sitofp %7 : vector<50x128xi32> to vector<50x128xf32>
    %9 = vector.broadcast %2 : vector<1x128xi32> to vector<50x128xi32>
    %10 = arith.cmpi eq, %3, %9 : vector<50x128xi32>
    %11 = arith.extui %10 : vector<50x128xi1> to vector<50x128xi32>
    %12 = arith.sitofp %11 : vector<50x128xi32> to vector<50x128xf32>
    %13 = vector.broadcast %1 : vector<1x128xi32> to vector<12x128xi32>
    %14 = arith.cmpi eq, %4, %13 : vector<12x128xi32>
    %15 = arith.extui %14 : vector<12x128xi1> to vector<12x128xi32>
    %16 = arith.sitofp %15 : vector<12x128xi32> to vector<12x128xf32>
    %c0_3 = arith.constant 0 : index
    %c0_4 = arith.constant 0 : index
    %17 = vector.load %arg2[%c0_3, %c0_4] : memref<32x50xf32, #tpu.memory_space<vmem>>, vector<32x50xf32>
    %cst = arith.constant dense<0.000000e+00> : vector<32x128xf32>
    %18 = tpu.matmul %17, %8, %cst {dimension_numbers = #tpu.dot_dimension_numbers<[1], [0], [0], [1], [0, 0, 1, 1], [], []>} : vector<32x50xf32>, vector<50x128xf32>, vector<32x128xf32> -> vector<32x128xf32>
    %c0_5 = arith.constant 0 : index
    %c0_6 = arith.constant 0 : index
    %19 = vector.load %arg2[%c0_5, %c0_6] : memref<32x50xf32, #tpu.memory_space<vmem>>, vector<32x50xf32>
    %cst_7 = arith.constant dense<0.000000e+00> : vector<32x128xf32>
    %20 = tpu.matmul %19, %12, %cst_7 {dimension_numbers = #tpu.dot_dimension_numbers<[1], [0], [0], [1], [0, 0, 1, 1], [], []>} : vector<32x50xf32>, vector<50x128xf32>, vector<32x128xf32> -> vector<32x128xf32>
    %c0_8 = arith.constant 0 : index
    %c0_9 = arith.constant 0 : index
    %21 = vector.load %arg3[%c0_8, %c0_9] : memref<64x12xf32, #tpu.memory_space<vmem>>, vector<64x12xf32>
    %cst_10 = arith.constant dense<0.000000e+00> : vector<64x128xf32>
    %22 = tpu.matmul %21, %16, %cst_10 {dimension_numbers = #tpu.dot_dimension_numbers<[1], [0], [0], [1], [0, 0, 1, 1], [], []>} : vector<64x12xf32>, vector<12x128xf32>, vector<64x128xf32> -> vector<64x128xf32>
    %23 = vector.extract_strided_slice %22 {offsets = [0, 0], sizes = [32, 128], strides = [1, 1]} : vector<64x128xf32> to vector<32x128xf32>
    %24 = vector.extract_strided_slice %22 {offsets = [32, 0], sizes = [32, 128], strides = [1, 1]} : vector<64x128xf32> to vector<32x128xf32>
    %25 = arith.mulf %18, %24 : vector<32x128xf32>
    %cst_11 = arith.constant dense<0.000000e+00> : vector<128xf32>
    %26 = vector.multi_reduction <add>, %25, %cst_11 [0] : vector<32x128xf32> to vector<128xf32>
    %27 = vector.shape_cast %26 : vector<128xf32> to vector<1x128xf32>
    %28 = arith.mulf %20, %24 : vector<32x128xf32>
    %cst_12 = arith.constant dense<0.000000e+00> : vector<128xf32>
    %29 = vector.multi_reduction <add>, %28, %cst_12 [0] : vector<32x128xf32> to vector<128xf32>
    %30 = vector.shape_cast %29 : vector<128xf32> to vector<1x128xf32>
    %31 = vector.broadcast %27 : vector<1x128xf32> to vector<32x128xf32>
    %32 = arith.mulf %31, %24 : vector<32x128xf32>
    %33 = arith.subf %18, %32 : vector<32x128xf32>
    %34 = vector.broadcast %30 : vector<1x128xf32> to vector<32x128xf32>
    %35 = arith.mulf %34, %24 : vector<32x128xf32>
    %36 = arith.subf %20, %35 : vector<32x128xf32>
    %37 = arith.addf %33, %23 : vector<32x128xf32>
    %38 = arith.subf %37, %36 : vector<32x128xf32>
    %39 = arith.mulf %38, %38 : vector<32x128xf32>
    %cst_13 = arith.constant dense<0.000000e+00> : vector<128xf32>
    %40 = vector.multi_reduction <add>, %39, %cst_13 [0] : vector<32x128xf32> to vector<128xf32>
    %41 = vector.shape_cast %40 : vector<128xf32> to vector<1x128xf32>
    %42 = math.sqrt %41 : vector<1x128xf32>
    %cst_14 = arith.constant 0.000000e+00 : f32
    %43 = vector.broadcast %cst_14 : f32 to vector<1x128xf32>
    %44 = arith.subf %43, %42 : vector<1x128xf32>
    %c0_15 = arith.constant 0 : index
    %c0_16 = arith.constant 0 : index
    %45 = vector.load %arg4[%c0_15, %c0_16] : memref<1x128xf32, #tpu.memory_space<vmem>>, vector<1x128xf32>
    tpu.vector_store %arg4[%c0_15, %c0_16], %44 {strides = array<i32>} : memref<1x128xf32, #tpu.memory_space<vmem>>, vector<1x128xf32>,
    return
  }
  func.func @transform_0(%arg0: i32) -> (i32, i32) {
    %c0_i32 = arith.constant 0 : i32
    %c0_i32_0 = arith.constant 0 : i32
    return %c0_i32, %arg0 : i32, i32
  }
  func.func @transform_1(%arg0: i32) -> (i32, i32) {
    %c0_i32 = arith.constant 0 : i32
    %c0_i32_0 = arith.constant 0 : i32
    %c0_i32_1 = arith.constant 0 : i32
    return %c0_i32, %c0_i32_0 : i32, i32
  }
  func.func @transform_2(%arg0: i32) -> (i32, i32) {
    %c0_i32 = arith.constant 0 : i32
    %c0_i32_0 = arith.constant 0 : i32
    %c0_i32_1 = arith.constant 0 : i32
    return %c0_i32, %c0_i32_0 : i32, i32
  }
  func.func @transform_3(%arg0: i32) -> (i32, i32) {
    %c0_i32 = arith.constant 0 : i32
    %c0_i32_0 = arith.constant 0 : i32
    return %c0_i32, %arg0 : i32, i32
  }
}

</mosaic_0001>

<llo_original>
// kernel: tpu_custom_call.1
$region0: #{tpu_custom_call.1}
  #allocation0 [shape = 'u32[]', space=smem, size = 0x4, offset = 0x4, fixed_abs, tag = 'smem constant byte address 0x4 - core index']
  #allocation1 [shape = 'u32[72,128]{1,0:T(1,128)}', space=vmem, size = 0x9000, scoped, tag = 'internal scratch']
  %s0 = inlined_call_operand.vmem [shape: s32[3,128], index: 0, kind: input, shape index: {}]
  %s1 = inlined_call_operand.vmem [shape: f32[32,50], index: 1, kind: input, shape index: {}]
  %s2 = inlined_call_operand.vmem [shape: f32[64,12], index: 2, kind: input, shape index: {}]
  %s3 = inlined_call_operand.hbm [shape: f32[1,128], index: 3, kind: output, shape index: {}]
  %s4 = sld [smem:[#allocation0]]
  $region22: #{tpu_custom_call.1} parent=0
    _
  %s6 = ssub.s32 1, %s4
  %s7 = scalar_select 0, %s6, %s4
  $region1: #{tpu_custom_call.1} parent=0
    #allocation2 [shape = 'u8[512]{0}', space=vmem, size = 0x400, scoped, tag = 'output window, operand 0, single buffered']
    #allocation3 [shape = 's32[1]{0}', space=sflag, size = 0x4, scoped, tag = 'scoped memory for tpu_custom_call.1']
    %8 = vsyncpa [#allocation3], 0
    // Predicated region
    $region2: #{tpu_custom_call.1} parent=1 // pred_check
      _
    $region3: #{tpu_custom_call.1} parent=1 // pred_check_branch
      %10 = sbr.rel (0) target = $region5
    $region4: #{tpu_custom_call.1} parent=1 // pred_region
      _
    $region5: #{tpu_custom_call.1} parent=1 // pred_fallthru
      _
    // Predicated region
    $region6: #{tpu_custom_call.1} parent=1 // pred_check
      _
    $region7: #{tpu_custom_call.1} parent=1 // pred_check_branch
      %12 = sbr.rel (0) target = $region9
    $region8: #{tpu_custom_call.1} parent=1 // pred_region
      _
    $region9: #{tpu_custom_call.1} parent=1 // pred_fallthru
      _
    // Predicated region
    $region10: #{tpu_custom_call.1} parent=1 // pred_check
      _
    $region11: #{tpu_custom_call.1} parent=1 // pred_check_branch
      %14 = sbr.rel (0) target = $region13
    $region12: #{tpu_custom_call.1} parent=1 // pred_region
      _
    $region13: #{tpu_custom_call.1} parent=1 // pred_fallthru
      _
    %v15 = vld [vmem:[%s0] sm:$0x1]
    %v16 = vld [vmem:[%s0 + $0x1] sm:$0x1]
    %v17 = vld [vmem:[%s0 + $0x2] sm:$0x1]
    %v18 = vlaneseq
    %v19 = vshrl.u32 %v18, 7
    %v20 = vadd.s32 %v19, 8
    %v21 = vadd.s32 %v19, 16
    %v22 = vadd.s32 %v19, 24
    %v23 = vadd.s32 %v19, 32
    %v24 = vadd.s32 %v19, 40
    %v25 = vadd.s32 %v19, 48
    %v26 = vperm.slane %v15, 0
    %vm27 = vcmp.eq.s32.totalorder %v19, %v26
    %vm28 = vcmp.eq.s32.totalorder %v20, %v26
    %vm29 = vcmp.eq.s32.totalorder %v21, %v26
    %vm30 = vcmp.eq.s32.totalorder %v22, %v26
    %vm31 = vcmp.eq.s32.totalorder %v23, %v26
    %vm32 = vcmp.eq.s32.totalorder %v24, %v26
    %vm33 = vcmp.eq.s32.totalorder %v25, %v26
    %v34 = vsel %vm27, 1, 0
    %v35 = vsel %vm28, 1, 0
    %v36 = vsel %vm29, 1, 0
    %v37 = vsel %vm30, 1, 0
    %v38 = vsel %vm31, 1, 0
    %v39 = vsel %vm32, 1, 0
    %v40 = vsel %vm33, 1, 0
    %v41 = vcvt.s32.f32 %v34
    %v42 = vcvt.s32.f32 %v35
    %v43 = vcvt.s32.f32 %v36
    %v44 = vcvt.s32.f32 %v37
    %v45 = vcvt.s32.f32 %v38
    %v46 = vcvt.s32.f32 %v39
    %v47 = vcvt.s32.f32 %v40
    %v48 = vperm.slane %v17, 0
    %vm49 = vcmp.eq.s32.totalorder %v19, %v48
    %vm50 = vcmp.eq.s32.totalorder %v20, %v48
    %vm51 = vcmp.eq.s32.totalorder %v21, %v48
    %vm52 = vcmp.eq.s32.totalorder %v22, %v48
    %vm53 = vcmp.eq.s32.totalorder %v23, %v48
    %vm54 = vcmp.eq.s32.totalorder %v24, %v48
    %vm55 = vcmp.eq.s32.totalorder %v25, %v48
    %v56 = vsel %vm49, 1, 0
    %v57 = vsel %vm50, 1, 0
    %v58 = vsel %vm51, 1, 0
    %v59 = vsel %vm52, 1, 0
    %v60 = vsel %vm53, 1, 0
    %v61 = vsel %vm54, 1, 0
    %v62 = vsel %vm55, 1, 0
    %v63 = vcvt.s32.f32 %v56
    %v64 = vcvt.s32.f32 %v57
    %v65 = vcvt.s32.f32 %v58
    %v66 = vcvt.s32.f32 %v59
    %v67 = vcvt.s32.f32 %v60
    %v68 = vcvt.s32.f32 %v61
    %v69 = vcvt.s32.f32 %v62
    %v70 = vperm.slane %v16, 0
    %vm71 = vcmp.eq.s32.totalorder %v19, %v70
    %vm72 = vcmp.eq.s32.totalorder %v20, %v70
    %v73 = vsel %vm71, 1, 0
    %v74 = vsel %vm72, 1, 0
    %v75 = vcvt.s32.f32 %v73
    %v76 = vcvt.s32.f32 %v74
    %v77 = vld [vmem:[%s1] sm:$0xff]
    %v78 = vld [vmem:[%s1 + $0x8] sm:$0xff]
    %v79 = vld [vmem:[%s1 + $0x10] sm:$0xff]
    %v80 = vld [vmem:[%s1 + $0x18] sm:$0xff]
    %vm81 = vcmask 408576
    %v83 = vsel %vm81, %v77, 0
    %v86 = vsel %vm81, %v78, 0
    %v89 = vsel %vm81, %v79, 0
    %v92 = vsel %vm81, %v80, 0
    %vm94 = vcmask 1041408
    %v96 = vsel %vm94, %v47, 0
    %98 = vmatpush.msra.mxu0 0.0
    %99 = vmatpush.msra.mxu0 0.0
    %100 = vmatpush.msra.mxu0 0.0
    %101 = vmatpush.msra.mxu0 0.0
    %102 = vmatpush.msra.mxu0 0.0
    %103 = vmatpush.msra.mxu0 0.0
    %104 = vmatpush.msra.mxu0 0.0
    %105 = vmatpush.msra.mxu0 0.0
    %106 = vmatpush.msra.mxu0 0.0
    %107 = vmatpush.msra.mxu0 %v96
    %108 = vmatpush.msra.mxu0 %v46
    %109 = vmatpush.msra.mxu0 %v45
    %110 = vmatpush.msra.mxu0 %v44
    %111 = vmatpush.msra.mxu0 %v43
    %112 = vmatpush.msra.mxu0 %v42
    %113 = vmatpush.msra.mxu0 %v41
    %114 = vmatmul.f32.gmra.mxu0 %v83
    %v115 = vpop.f32.mrf.mxu0
    %v116 = vadd.f32 0.0, %v115
    %117 = vmatmul.f32.gmra.mxu0 %v86
    %v118 = vpop.f32.mrf.mxu0
    %v119 = vadd.f32 0.0, %v118
    %120 = vmatmul.f32.gmra.mxu0 %v89
    %v121 = vpop.f32.mrf.mxu0
    %v122 = vadd.f32 0.0, %v121
    %123 = vmatmul.f32.gmra.mxu0 %v92
    %v124 = vpop.f32.mrf.mxu0
    %v125 = vadd.f32 0.0, %v124
    %126 = vdwg.mxu0
    %v128 = vsel %vm94, %v69, 0
    %130 = vmatpush.msra.mxu0 0.0
    %131 = vmatpush.msra.mxu0 0.0
    %132 = vmatpush.msra.mxu0 0.0
    %133 = vmatpush.msra.mxu0 0.0
    %134 = vmatpush.msra.mxu0 0.0
    %135 = vmatpush.msra.mxu0 0.0
    %136 = vmatpush.msra.mxu0 0.0
    %137 = vmatpush.msra.mxu0 0.0
    %138 = vmatpush.msra.mxu0 0.0
    %139 = vmatpush.msra.mxu0 %v128
    %140 = vmatpush.msra.mxu0 %v68
    %141 = vmatpush.msra.mxu0 %v67
    %142 = vmatpush.msra.mxu0 %v66
    %143 = vmatpush.msra.mxu0 %v65
    %144 = vmatpush.msra.mxu0 %v64
    %145 = vmatpush.msra.mxu0 %v63
    %146 = vmatmul.f32.gmra.mxu0 %v83
    %v147 = vpop.f32.mrf.mxu0
    %v148 = vadd.f32 0.0, %v147
    %149 = vmatmul.f32.gmra.mxu0 %v86
    %v150 = vpop.f32.mrf.mxu0
    %v151 = vadd.f32 0.0, %v150
    %152 = vmatmul.f32.gmra.mxu0 %v89
    %v153 = vpop.f32.mrf.mxu0
    %v154 = vadd.f32 0.0, %v153
    %155 = vmatmul.f32.gmra.mxu0 %v92
    %v156 = vpop.f32.mrf.mxu0
    %v157 = vadd.f32 0.0, %v156
    %158 = vdwg.mxu0
    %v159 = vld [vmem:[%s2] sm:$0xff]
    %v160 = vld [vmem:[%s2 + $0x8] sm:$0xff]
    %v161 = vld [vmem:[%s2 + $0x10] sm:$0xff]
    %v162 = vld [vmem:[%s2 + $0x18] sm:$0xff]
    %v163 = vld [vmem:[%s2 + $0x20] sm:$0xff]
    %v164 = vld [vmem:[%s2 + $0x28] sm:$0xff]
    %v165 = vld [vmem:[%s2 + $0x30] sm:$0xff]
    %v166 = vld [vmem:[%s2 + $0x38] sm:$0xff]
    %vm167 = vcmask 97280
    %v169 = vsel %vm167, %v159, 0
    %v172 = vsel %vm167, %v160, 0
    %v175 = vsel %vm167, %v161, 0
    %v178 = vsel %vm167, %v162, 0
    %v181 = vsel %vm167, %v163, 0
    %v184 = vsel %vm167, %v164, 0
    %v187 = vsel %vm167, %v165, 0
    %v190 = vsel %vm167, %v166, 0
    %vm192 = vcmask 1043456
    %v194 = vsel %vm192, %v76, 0
    %196 = vmatpush.msra.mxu0 0.0
    %197 = vmatpush.msra.mxu0 0.0
    %198 = vmatpush.msra.mxu0 0.0
    %199 = vmatpush.msra.mxu0 0.0
    %200 = vmatpush.msra.mxu0 0.0
    %201 = vmatpush.msra.mxu0 0.0
    %202 = vmatpush.msra.mxu0 0.0
    %203 = vmatpush.msra.mxu0 0.0
    %204 = vmatpush.msra.mxu0 0.0
    %205 = vmatpush.msra.mxu0 0.0
    %206 = vmatpush.msra.mxu0 0.0
    %207 = vmatpush.msra.mxu0 0.0
    %208 = vmatpush.msra.mxu0 0.0
    %209 = vmatpush.msra.mxu0 0.0
    %210 = vmatpush.msra.mxu0 %v194
    %211 = vmatpush.msra.mxu0 %v75
    %212 = vmatmul.f32.gmra.mxu0 %v169
    %v213 = vpop.f32.mrf.mxu0
    %v214 = vadd.f32 0.0, %v213
    %215 = vmatmul.f32.gmra.mxu0 %v172
    %v216 = vpop.f32.mrf.mxu0
    %v217 = vadd.f32 0.0, %v216
    %218 = vmatmul.f32.gmra.mxu0 %v175
    %v219 = vpop.f32.mrf.mxu0
    %v220 = vadd.f32 0.0, %v219
    %221 = vmatmul.f32.gmra.mxu0 %v178
    %v222 = vpop.f32.mrf.mxu0
    %v223 = vadd.f32 0.0, %v222
    %224 = vmatmul.f32.gmra.mxu0 %v181
    %v225 = vpop.f32.mrf.mxu0
    %v226 = vadd.f32 0.0, %v225
    %227 = vmatmul.f32.gmra.mxu0 %v184
    %v228 = vpop.f32.mrf.mxu0
    %v229 = vadd.f32 0.0, %v228
    %230 = vmatmul.f32.gmra.mxu0 %v187
    %v231 = vpop.f32.mrf.mxu0
    %v232 = vadd.f32 0.0, %v231
    %233 = vmatmul.f32.gmra.mxu0 %v190
    %v234 = vpop.f32.mrf.mxu0
    %v235 = vadd.f32 0.0, %v234
    %236 = vdwg.mxu0
    %v237 = vmul.f32 %v116, %v226
    %v238 = vmul.f32 %v119, %v229
    %v239 = vmul.f32 %v122, %v232
    %v240 = vmul.f32 %v125, %v235
    %v241 = vadd.f32 %v237, %v238
    %v242 = vadd.f32 %v241, %v239
    %v243 = vadd.f32 %v242, %v240
    %v244 = vrot.slane %v243, 4
    %v245 = vadd.f32 %v243, %v244
    %v246 = vrot.slane %v245, 2
    %v247 = vadd.f32 %v245, %v246
    %v248 = vrot.slane %v247, 1
    %v249 = vadd.f32 %v247, %v248
    %v250 = vmul.f32 %v148, %v226
    %v251 = vmul.f32 %v151, %v229
    %v252 = vmul.f32 %v154, %v232
    %v253 = vmul.f32 %v157, %v235
    %v254 = vadd.f32 %v250, %v251
    %v255 = vadd.f32 %v254, %v252
    %v256 = vadd.f32 %v255, %v253
    %v257 = vrot.slane %v256, 4
    %v258 = vadd.f32 %v256, %v257
    %v259 = vrot.slane %v258, 2
    %v260 = vadd.f32 %v258, %v259
    %v261 = vrot.slane %v260, 1
    %v262 = vadd.f32 %v260, %v261
    %v263 = vmul.f32 %v249, %v226
    %v264 = vmul.f32 %v249, %v229
    %v265 = vmul.f32 %v249, %v232
    %v266 = vmul.f32 %v249, %v235
    %v267 = vsub.f32 %v116, %v263
    %v268 = vsub.f32 %v119, %v264
    %v269 = vsub.f32 %v122, %v265
    %v270 = vsub.f32 %v125, %v266
    %v271 = vmul.f32 %v262, %v226
    %v272 = vmul.f32 %v262, %v229
    %v273 = vmul.f32 %v262, %v232
    %v274 = vmul.f32 %v262, %v235
    %v275 = vsub.f32 %v148, %v271
    %v276 = vsub.f32 %v151, %v272
    %v277 = vsub.f32 %v154, %v273
    %v278 = vsub.f32 %v157, %v274
    %v279 = vadd.f32 %v267, %v214
    %v280 = vadd.f32 %v268, %v217
    %v281 = vadd.f32 %v269, %v220
    %v282 = vadd.f32 %v270, %v223
    %v283 = vsub.f32 %v279, %v275
    %v284 = vsub.f32 %v280, %v276
    %v285 = vsub.f32 %v281, %v277
    %v286 = vsub.f32 %v282, %v278
    %v287 = vmul.f32 %v283, %v283
    %v288 = vmul.f32 %v284, %v284
    %v289 = vmul.f32 %v285, %v285
    %v290 = vmul.f32 %v286, %v286
    %v291 = vadd.f32 %v287, %v288
    %v292 = vadd.f32 %v291, %v289
    %v293 = vadd.f32 %v292, %v290
    %v294 = vrot.slane %v293, 4
    %v295 = vadd.f32 %v293, %v294
    %v296 = vrot.slane %v295, 2
    %v297 = vadd.f32 %v295, %v296
    %v298 = vrot.slane %v297, 1
    %v299 = vadd.f32 %v297, %v298
    %v300 = vrsqrt.pop %v299
    %v301 = vmul.f32 %v300, %v299
    %v302 = vmul.f32 %v301, %v300
    %v303 = vmul.f32 0.5, %v302
    %v304 = vsub.f32 1.5, %v303
    %v305 = vmul.f32 %v300, %v304
    %v306 = vmul.f32 %v299, %v305
    %vm307 = vcmp.eq.f32.partialorder %v299, inf
    %v308 = vsel %vm307, %v299, %v306
    %vm309 = vcmp.eq.f32.partialorder %v299, 0.0
    %v310 = vand.u32 %v299, 2147483648
    %v311 = vsel %vm309, %v310, %v308
    %v312 = vsub.f32 0.0, %v311
    %313 = vst [vmem:[#allocation2] sm:$0x1] %v312
    // Predicated region
    $region14: #{tpu_custom_call.1} parent=1 // pred_check
      _
    $region15: #{tpu_custom_call.1} parent=1 // pred_check_branch
      %315 = sbr.rel (0) target = $region17
    $region16: #{tpu_custom_call.1} parent=1 // pred_region
      %317 = vsyncadd [#allocation3], 0
      %s319 = sshll.u32 [#allocation2], 4
      %s320 = int_to_ptr.vmem [resolvable:$true] %s319
      %s321 = sshll.u32 %s3, 4
      %s322 = int_to_ptr.hbm [resolvable:$true] %s321
      %324 = dma.vmem_to_hbm [thread:$0]  %s320, 16, %s322, [#allocation3]
    $region17: #{tpu_custom_call.1} parent=1 // pred_fallthru
      _
    // Predicated region
    $region18: #{tpu_custom_call.1} parent=1 // pred_check
      _
    $region19: #{tpu_custom_call.1} parent=1 // pred_check_branch
      %326 = sbr.rel (0) target = $region21
    $region20: #{tpu_custom_call.1} parent=1 // pred_region
      %328 = dma.done [#allocation3], 16
    $region21: #{tpu_custom_call.1} parent=1 // pred_fallthru
      _
    %329 = vsyncpa [#allocation3], 1

</llo_original>
